<compile_context>
chip_gen: v7x
topology: tpu7x:2x2x1
jax: 0.10.0
libtpu: 0.0.40
codegen_flags: <defaults>
</compile_context>

<pallas_src>
import functools

import jax
import jax.numpy as jnp
from jax.experimental import pallas as pl
from jax.experimental.pallas import tpu as pltpu


def _round_up(x, m):
    return ((x + m - 1) // m) * m


def _mlp_kernel(x_ref, w1_ref, b1_ref, w2_ref, b2_ref, w3_ref, b3_ref,
                o_ref, *, out_sigmoid: bool, crisp_threshold):
    """Fused 3-layer MLP on one batch tile. All operands live in VMEM."""
    compute_dtype = w1_ref.dtype

    # Cast the activation stream to the matmul dtype *inside* the kernel so the
    # obs HBM->VMEM DMA stays in the caller's dtype (no extra HBM pass).
    x = x_ref[...].astype(compute_dtype)

    # layer1 + ReLU (f32 accumulate, f32 bias add)
    h1 = jnp.dot(x, w1_ref[...], preferred_element_type=jnp.float32)
    h1 = jnp.maximum(h1 + b1_ref[...], 0.0).astype(compute_dtype)

    # layer2 + ReLU
    h2 = jnp.dot(h1, w2_ref[...], preferred_element_type=jnp.float32)
    h2 = jnp.maximum(h2 + b2_ref[...], 0.0).astype(compute_dtype)

    # layer3 (+ optional sigmoid, + optional fused crisp threshold)
    out = jnp.dot(h2, w3_ref[...], preferred_element_type=jnp.float32)
    out = out + b3_ref[...]

    if (crisp_threshold is not None and out_sigmoid
            and float(crisp_threshold) == 0.5):
        # sigmoid(x) >= 0.5  <=>  x >= 0: skip the transcendental entirely and
        # avoid the numerically delicate compare exactly at 0.5.
        out = jnp.where(out >= 0.0, 1.0, 0.0)
    else:
        if out_sigmoid:
            out = jax.nn.sigmoid(out)
        if crisp_threshold is not None:
            # torch: x<th -> 0, x>=th -> 1
            out = jnp.where(out >= crisp_threshold, 1.0, 0.0)

    o_ref[...] = out.astype(o_ref.dtype)


def feedforward_nn(obs, params, *, out_sigmoid=False, crisp_threshold=None,
                   batch_tile=None, compute_dtype=jnp.bfloat16,
                   out_dtype=None):
    """Pallas-backed forward pass equivalent to FeedForwardNN.forward.

    obs:    (B, in_dim); pass bf16 obs to halve the obs HBM->VMEM stream.
    params: dict with w1 (in_dim, L), b1 (1, L), w2 (L, L), b2 (1, L),
            w3 (L, out_dim), b3 (1, out_dim)
    """
    w1, b1 = params["w1"], params["b1"]
    w2, b2 = params["w2"], params["b2"]
    w3, b3 = params["w3"], params["b3"]

    B, in_dim = obs.shape
    layer_dim = w1.shape[1]
    out_dim = w3.shape[1]

    # Output dtype: bf16 by default (halves writeback; exact for 0/1 crisp
    # outputs), f32 on the f32 compute path for tight parity.
    if out_dtype is None:
        out_dtype = (jnp.bfloat16
                     if jnp.dtype(compute_dtype) == jnp.dtype(jnp.bfloat16)
                     else jnp.float32)

    # ---- matmul operands in compute_dtype, biases stay f32 ------------------
    w1c = w1.astype(compute_dtype)
    w2c = w2.astype(compute_dtype)
    w3c = w3.astype(compute_dtype)
    b1c = b1.astype(jnp.float32)
    b2c = b2.astype(jnp.float32)
    b3c = b3.astype(jnp.float32)

    # ---- batch tiling --------------------------------------------------------
    # Sublane multiple for the batch-tiled (obs / out) blocks: 8 for 32-bit,
    # 16 when a 16-bit array is tiled along the batch axis.
    min_itemsize = min(jnp.dtype(obs.dtype).itemsize,
                       jnp.dtype(out_dtype).itemsize)
    sub = 8 * (4 // max(min_itemsize, 1))

    if batch_tile is None:
        # >= 2 (even) grid steps so "parallel" shards across both v7x
        # TensorCores; tiles capped at 4096 rows so large B amortizes the
        # ~0.35 us/step grid overhead (v5e/v6e) while staying a few MiB of
        # VMEM -- comfortably inside v7x's 64 MiB physical / 32 MiB scoped.
        cap = 4096
        n_steps = max(2, pl.cdiv(B, cap))
        n_steps += n_steps % 2
        tb = _round_up(pl.cdiv(B, n_steps), sub)
    else:
        tb = _round_up(int(batch_tile), sub)
    if tb >= B:
        tb = B  # single full-extent block: always a legal block shape

    # No obs padding / output slicing: grid is cdiv-based and Pallas masks the
    # ragged last batch tile (OOB reads padded, OOB writes dropped).
    grid = (pl.cdiv(B, tb),)

    rep = lambda i: (0, 0)  # weights/biases: same block every grid step
    # NOTE: constant-index weight blocks could be single-buffered via
    # pipeline_mode=pl.Buffered(1) (~26 KB VMEM back); skipped as noise.

    kernel = functools.partial(_mlp_kernel, out_sigmoid=out_sigmoid,
                               crisp_threshold=crisp_threshold)

    out = pl.pallas_call(
        kernel,
        out_shape=jax.ShapeDtypeStruct((B, out_dim), out_dtype),
        grid=grid,
        in_specs=[
            pl.BlockSpec((tb, in_dim), lambda i: (i, 0)),        # obs tile
            pl.BlockSpec((in_dim, layer_dim), rep),              # w1
            pl.BlockSpec((1, layer_dim), rep),                   # b1
            pl.BlockSpec((layer_dim, layer_dim), rep),           # w2
            pl.BlockSpec((1, layer_dim), rep),                   # b2
            pl.BlockSpec((layer_dim, out_dim), rep),             # w3 (no pad)
            pl.BlockSpec((1, out_dim), rep),                     # b3 (no pad)
        ],
        out_specs=pl.BlockSpec((tb, out_dim), lambda i: (i, 0)),
        compiler_params=pltpu.CompilerParams(
            dimension_semantics=("parallel",),      # megacore sharding on v7x
            vmem_limit_bytes=32 * 1024 * 1024,      # safe on v5e/v6e/v7x
        ),
    )(obs, w1c, b1c, w2c, b2c, w3c, b3c)

    return out


def crisp_forward(obs, params, *, out_sigmoid=False, threshold=0.5, **kw):
    """Equivalent of FeedForwardNN.crisp_forward; threshold fused in-kernel."""
    return feedforward_nn(obs, params, out_sigmoid=out_sigmoid,
                          crisp_threshold=threshold, **kw)


def init_params(key, in_dim, out_dim, layer_dim=64):
    """PyTorch-Linear-style init (uniform +/- 1/sqrt(fan_in)); weights stored
    (fan_in, fan_out), i.e. transposed vs. nn.Linear."""
    def linear(k, fan_in, fan_out):
        kw, kb = jax.random.split(k)
        bound = 1.0 / jnp.sqrt(jnp.float32(fan_in))
        w = jax.random.uniform(kw, (fan_in, fan_out), jnp.float32, -bound, bound)
        b = jax.random.uniform(kb, (1, fan_out), jnp.float32, -bound, bound)
        return w, b

    k1, k2, k3 = jax.random.split(key, 3)
    w1, b1 = linear(k1, in_dim, layer_dim)
    w2, b2 = linear(k2, layer_dim, layer_dim)
    w3, b3 = linear(k3, layer_dim, out_dim)
    return {"w1": w1, "b1": b1, "w2": w2, "b2": b2, "w3": w3, "b3": b3}


def _reference(obs, params, out_sigmoid=False):
    """Pure-JAX f32 reference matching FeedForwardNN.forward."""
    h1 = jnp.maximum(obs @ params["w1"] + params["b1"], 0.0)
    h2 = jnp.maximum(h1 @ params["w2"] + params["b2"], 0.0)
    out = h2 @ params["w3"] + params["b3"]
    if out_sigmoid:
        out = jax.nn.sigmoid(out)
    return out


if __name__ == "__main__":
    key = jax.random.PRNGKey(0)
    in_dim, out_dim, layer_dim = 16, 8, 64
    batch = 8

    k_params, k_obs, k_obs2 = jax.random.split(key, 3)
    params = init_params(k_params, in_dim, out_dim, layer_dim)
    obs = jax.random.normal(k_obs, (batch, in_dim), jnp.float32)

    ref = _reference(obs, params, out_sigmoid=False)
    ref_sig = _reference(obs, params, out_sigmoid=True)

    # 1) f32 compute path (f32 output): tight agreement with the reference.
    out_f32 = jax.block_until_ready(
        feedforward_nn(obs, params, out_sigmoid=False,
                       compute_dtype=jnp.float32))
    assert out_f32.shape == (batch, out_dim) and out_f32.dtype == jnp.float32
    assert jnp.allclose(out_f32, ref, atol=1e-5, rtol=1e-5)

    out_f32_sig = jax.block_until_ready(
        feedforward_nn(obs, params, out_sigmoid=True,
                       compute_dtype=jnp.float32))
    assert jnp.allclose(out_f32_sig, ref_sig, atol=1e-5, rtol=1e-5)

    # 2) default bf16-matmul / f32-accumulate / bf16-output path.
    out_bf16 = jax.block_until_ready(
        feedforward_nn(obs, params, out_sigmoid=False))
    assert out_bf16.dtype == jnp.bfloat16
    assert jnp.allclose(out_bf16.astype(jnp.float32), ref, atol=5e-2, rtol=5e-2)

    out_bf16_sig = jax.block_until_ready(
        feedforward_nn(obs, params, out_sigmoid=True))
    assert jnp.allclose(out_bf16_sig.astype(jnp.float32), ref_sig,
                        atol=5e-2, rtol=5e-2)

    # 3) fused crisp_forward (sigmoid + threshold 0.5 folded to logit >= 0).
    crisp32 = jax.block_until_ready(
        crisp_forward(obs, params, out_sigmoid=True, threshold=0.5,
                      compute_dtype=jnp.float32))
    crisp_ref = jnp.where(ref_sig >= 0.5, 1.0, 0.0)
    decided = jnp.abs(ref_sig - 0.5) > 1e-3  # ignore knife-edge logits
    assert crisp32.shape == (batch, out_dim)
    assert bool(jnp.all(jnp.where(decided, crisp32 == crisp_ref, True)))

    crisp_bf16 = jax.block_until_ready(
        crisp_forward(obs, params, out_sigmoid=True, threshold=0.5))
    assert set(jnp.unique(crisp_bf16).astype(jnp.float32).tolist()) <= {0.0, 1.0}

    # 4) multi-step grid with a ragged last batch tile (B=200, tile=64 -> 4).
    batch2 = 200
    obs2 = jax.random.normal(k_obs2, (batch2, in_dim), jnp.float32)
    ref2 = _reference(obs2, params, out_sigmoid=False)
    out2 = jax.block_until_ready(
        feedforward_nn(obs2, params, out_sigmoid=False, batch_tile=64))
    assert out2.shape == (batch2, out_dim)
    assert jnp.allclose(out2.astype(jnp.float32), ref2, atol=5e-2, rtol=5e-2)

    # 5) default auto-tile (>=2 grid steps) + bf16 obs (halved obs DMA bytes).
    out3 = jax.block_until_ready(
        feedforward_nn(obs2.astype(jnp.bfloat16), params, out_sigmoid=False))
    assert out3.shape == (batch2, out_dim)
    assert jnp.allclose(out3.astype(jnp.float32), ref2, atol=7e-2, rtol=7e-2)

    print("KERNEL_OK")
</pallas_src>

<mosaic_0001>
module attributes {stable_mosaic.version = 11 : i64} {
  func.func @_mlp_kernel(%arg0: i32, %arg1: memref<8x16xf32, #tpu.memory_space<vmem>>, %arg2: memref<16x64xf32, #tpu.memory_space<vmem>>, %arg3: memref<1x64xf32, #tpu.memory_space<vmem>>, %arg4: memref<64x64xf32, #tpu.memory_space<vmem>>, %arg5: memref<1x64xf32, #tpu.memory_space<vmem>>, %arg6: memref<64x8xf32, #tpu.memory_space<vmem>>, %arg7: memref<1x8xf32, #tpu.memory_space<vmem>>, %arg8: memref<8x8xf32, #tpu.memory_space<vmem>>) attributes {dimension_semantics = [#tpu.dimension_semantics<parallel>], iteration_bounds = array<i64: 1>, scalar_prefetch = 0 : i64, scratch_operands = 0 : i64, tpu.core_type = #tpu.core_type<tc>, window_params = [{transform_indices = @transform_0, window_bounds = array<i64: 8, 16>}, {pipeline_mode = #tpu.pipeline_mode<synchronous>, transform_indices = @transform_1, window_bounds = array<i64: 16, 64>}, {pipeline_mode = #tpu.pipeline_mode<synchronous>, transform_indices = @transform_2, window_bounds = array<i64: 1, 64>}, {pipeline_mode = #tpu.pipeline_mode<synchronous>, transform_indices = @transform_3, window_bounds = array<i64: 64, 64>}, {pipeline_mode = #tpu.pipeline_mode<synchronous>, transform_indices = @transform_4, window_bounds = array<i64: 1, 64>}, {pipeline_mode = #tpu.pipeline_mode<synchronous>, transform_indices = @transform_5, window_bounds = array<i64: 64, 8>}, {pipeline_mode = #tpu.pipeline_mode<synchronous>, transform_indices = @transform_6, window_bounds = array<i64: 1, 8>}, {transform_indices = @transform_7, window_bounds = array<i64: 8, 8>}]} {
    %c0 = arith.constant 0 : index
    %c0_0 = arith.constant 0 : index
    %0 = vector.load %arg1[%c0, %c0_0] : memref<8x16xf32, #tpu.memory_space<vmem>>, vector<8x16xf32>
    %c0_1 = arith.constant 0 : index
    %c0_2 = arith.constant 0 : index
    %1 = vector.load %arg2[%c0_1, %c0_2] : memref<16x64xf32, #tpu.memory_space<vmem>>, vector<16x64xf32>
    %cst = arith.constant dense<0.000000e+00> : vector<8x64xf32>
    %2 = tpu.matmul %0, %1, %cst {dimension_numbers = #tpu.dot_dimension_numbers<[1], [0], [0], [1], [0, 0, 1, 1], [], []>} : vector<8x16xf32>, vector<16x64xf32>, vector<8x64xf32> -> vector<8x64xf32>
    %c0_3 = arith.constant 0 : index
    %c0_4 = arith.constant 0 : index
    %3 = vector.load %arg3[%c0_3, %c0_4] : memref<1x64xf32, #tpu.memory_space<vmem>>, vector<1x64xf32>
    %4 = vector.broadcast %3 : vector<1x64xf32> to vector<8x64xf32>
    %5 = arith.addf %2, %4 : vector<8x64xf32>
    %cst_5 = arith.constant 0.000000e+00 : f32
    %6 = vector.broadcast %cst_5 : f32 to vector<8x64xf32>
    %7 = arith.maximumf %5, %6 : vector<8x64xf32>
    %c0_6 = arith.constant 0 : index
    %c0_7 = arith.constant 0 : index
    %8 = vector.load %arg4[%c0_6, %c0_7] : memref<64x64xf32, #tpu.memory_space<vmem>>, vector<64x64xf32>
    %cst_8 = arith.constant dense<0.000000e+00> : vector<8x64xf32>
    %9 = tpu.matmul %7, %8, %cst_8 {dimension_numbers = #tpu.dot_dimension_numbers<[1], [0], [0], [1], [0, 0, 1, 1], [], []>} : vector<8x64xf32>, vector<64x64xf32>, vector<8x64xf32> -> vector<8x64xf32>
    %c0_9 = arith.constant 0 : index
    %c0_10 = arith.constant 0 : index
    %10 = vector.load %arg5[%c0_9, %c0_10] : memref<1x64xf32, #tpu.memory_space<vmem>>, vector<1x64xf32>
    %11 = vector.broadcast %10 : vector<1x64xf32> to vector<8x64xf32>
    %12 = arith.addf %9, %11 : vector<8x64xf32>
    %cst_11 = arith.constant 0.000000e+00 : f32
    %13 = vector.broadcast %cst_11 : f32 to vector<8x64xf32>
    %14 = arith.maximumf %12, %13 : vector<8x64xf32>
    %c0_12 = arith.constant 0 : index
    %c0_13 = arith.constant 0 : index
    %15 = vector.load %arg6[%c0_12, %c0_13] : memref<64x8xf32, #tpu.memory_space<vmem>>, vector<64x8xf32>
    %cst_14 = arith.constant dense<0.000000e+00> : vector<8x8xf32>
    %16 = tpu.matmul %14, %15, %cst_14 {dimension_numbers = #tpu.dot_dimension_numbers<[1], [0], [0], [1], [0, 0, 1, 1], [], []>} : vector<8x64xf32>, vector<64x8xf32>, vector<8x8xf32> -> vector<8x8xf32>
    %c0_15 = arith.constant 0 : index
    %c0_16 = arith.constant 0 : index
    %17 = vector.load %arg7[%c0_15, %c0_16] : memref<1x8xf32, #tpu.memory_space<vmem>>, vector<1x8xf32>
    %18 = vector.broadcast %17 : vector<1x8xf32> to vector<8x8xf32>
    %19 = arith.addf %16, %18 : vector<8x8xf32>
    %c0_17 = arith.constant 0 : index
    %c0_18 = arith.constant 0 : index
    %20 = vector.load %arg8[%c0_17, %c0_18] : memref<8x8xf32, #tpu.memory_space<vmem>>, vector<8x8xf32>
    tpu.vector_store %arg8[%c0_17, %c0_18], %19 {strides = array<i32>} : memref<8x8xf32, #tpu.memory_space<vmem>>, vector<8x8xf32>,
    return
  }
  func.func @transform_0(%arg0: i32) -> (i32, i32) {
    %c0_i32 = arith.constant 0 : i32
    %c0_i32_0 = arith.constant 0 : i32
    return %arg0, %c0_i32 : i32, i32
  }
  func.func @transform_1(%arg0: i32) -> (i32, i32) {
    %c0_i32 = arith.constant 0 : i32
    %c0_i32_0 = arith.constant 0 : i32
    %c0_i32_1 = arith.constant 0 : i32
    return %c0_i32, %c0_i32_0 : i32, i32
  }
  func.func @transform_2(%arg0: i32) -> (i32, i32) {
    %c0_i32 = arith.constant 0 : i32
    %c0_i32_0 = arith.constant 0 : i32
    %c0_i32_1 = arith.constant 0 : i32
    return %c0_i32, %c0_i32_0 : i32, i32
  }
  func.func @transform_3(%arg0: i32) -> (i32, i32) {
    %c0_i32 = arith.constant 0 : i32
    %c0_i32_0 = arith.constant 0 : i32
    %c0_i32_1 = arith.constant 0 : i32
    return %c0_i32, %c0_i32_0 : i32, i32
  }
  func.func @transform_4(%arg0: i32) -> (i32, i32) {
    %c0_i32 = arith.constant 0 : i32
    %c0_i32_0 = arith.constant 0 : i32
    %c0_i32_1 = arith.constant 0 : i32
    return %c0_i32, %c0_i32_0 : i32, i32
  }
  func.func @transform_5(%arg0: i32) -> (i32, i32) {
    %c0_i32 = arith.constant 0 : i32
    %c0_i32_0 = arith.constant 0 : i32
    %c0_i32_1 = arith.constant 0 : i32
    return %c0_i32, %c0_i32_0 : i32, i32
  }
  func.func @transform_6(%arg0: i32) -> (i32, i32) {
    %c0_i32 = arith.constant 0 : i32
    %c0_i32_0 = arith.constant 0 : i32
    %c0_i32_1 = arith.constant 0 : i32
    return %c0_i32, %c0_i32_0 : i32, i32
  }
  func.func @transform_7(%arg0: i32) -> (i32, i32) {
    %c0_i32 = arith.constant 0 : i32
    %c0_i32_0 = arith.constant 0 : i32
    return %arg0, %c0_i32 : i32, i32
  }
}

</mosaic_0001>

<llo_original>
// kernel: tpu_custom_call.1
$region0: #{tpu_custom_call.1}
  #allocation0 [shape = 'u32[]', space=smem, size = 0x4, offset = 0x4, fixed_abs, tag = 'smem constant byte address 0x4 - core index']
  #allocation1 [shape = 'u32[144,128]{1,0:T(1,128)}', space=vmem, size = 0x12000, scoped, tag = 'internal scratch']
  %s0 = inlined_call_operand.hbm [shape: f32[8,16], index: 0, kind: input, shape index: {}]
  %s1 = inlined_call_operand.vmem [shape: f32[16,64], index: 1, kind: input, shape index: {}]
  %s2 = inlined_call_operand.vmem [shape: f32[1,64], index: 2, kind: input, shape index: {}]
  %s3 = inlined_call_operand.vmem [shape: f32[64,64], index: 3, kind: input, shape index: {}]
  %s4 = inlined_call_operand.vmem [shape: f32[1,64], index: 4, kind: input, shape index: {}]
  %s5 = inlined_call_operand.vmem [shape: f32[64,8], index: 5, kind: input, shape index: {}]
  %s6 = inlined_call_operand.vmem [shape: f32[1,8], index: 6, kind: input, shape index: {}]
  %s7 = inlined_call_operand.hbm [shape: f32[8,8], index: 7, kind: output, shape index: {}]
  %s8 = sld [smem:[#allocation0]]
  $region42: #{tpu_custom_call.1} parent=0
    _
  %s10 = ssub.s32 1, %s8
  %s11 = scalar_select 0, %s10, %s8
  $region1: #{tpu_custom_call.1} parent=0
    #allocation2 [shape = 'u8[4096]{0}', space=vmem, size = 0x1000, scoped, tag = 'input window, operand 0, single buffered']
    #allocation3 [shape = 's32[1]{0}', space=sflag, size = 0x4, scoped, tag = 'scoped memory for tpu_custom_call.1']
    #allocation4 [shape = 's32[1]{0}', space=sflag, size = 0x4, scoped, tag = 'scoped memory for tpu_custom_call.1']
    #allocation5 [shape = 'u8[4096]{0}', space=vmem, size = 0x1000, scoped, tag = 'output window, operand 0, single buffered']
    %12 = vsyncpa [#allocation3], 0
    %13 = vsyncpa [#allocation4], 0
    // Predicated region
    $region2: #{tpu_custom_call.1} parent=1 // pred_check
      _
    $region3: #{tpu_custom_call.1} parent=1 // pred_check_branch
      %15 = sbr.rel (0) target = $region5
    $region4: #{tpu_custom_call.1} parent=1 // pred_region
      %s17 = ssub.s32 128, 128
      %18 = vsyncadd [#allocation3], %s17
      %s20 = sshll.u32 [#allocation2], 4
      %s21 = int_to_ptr.vmem [resolvable:$true] %s20
      %23 = dma.hbm_to_vmem [thread:$0]  %s0, 128, %s21, [#allocation3]
    $region5: #{tpu_custom_call.1} parent=1 // pred_fallthru
      _
    // Predicated region
    $region6: #{tpu_custom_call.1} parent=1 // pred_check
      _
    $region7: #{tpu_custom_call.1} parent=1 // pred_check_branch
      %25 = sbr.rel (0) target = $region9
    $region8: #{tpu_custom_call.1} parent=1 // pred_region
      _
    $region9: #{tpu_custom_call.1} parent=1 // pred_fallthru
      _
    // Predicated region
    $region10: #{tpu_custom_call.1} parent=1 // pred_check
      _
    $region11: #{tpu_custom_call.1} parent=1 // pred_check_branch
      %27 = sbr.rel (0) target = $region13
    $region12: #{tpu_custom_call.1} parent=1 // pred_region
      _
    $region13: #{tpu_custom_call.1} parent=1 // pred_fallthru
      _
    // Predicated region
    $region14: #{tpu_custom_call.1} parent=1 // pred_check
      _
    $region15: #{tpu_custom_call.1} parent=1 // pred_check_branch
      %29 = sbr.rel (0) target = $region17
    $region16: #{tpu_custom_call.1} parent=1 // pred_region
      _
    $region17: #{tpu_custom_call.1} parent=1 // pred_fallthru
      _
    // Predicated region
    $region18: #{tpu_custom_call.1} parent=1 // pred_check
      _
    $region19: #{tpu_custom_call.1} parent=1 // pred_check_branch
      %31 = sbr.rel (0) target = $region21
    $region20: #{tpu_custom_call.1} parent=1 // pred_region
      _
    $region21: #{tpu_custom_call.1} parent=1 // pred_fallthru
      _
    // Predicated region
    $region22: #{tpu_custom_call.1} parent=1 // pred_check
      _
    $region23: #{tpu_custom_call.1} parent=1 // pred_check_branch
      %33 = sbr.rel (0) target = $region25
    $region24: #{tpu_custom_call.1} parent=1 // pred_region
      _
    $region25: #{tpu_custom_call.1} parent=1 // pred_fallthru
      _
    // Predicated region
    $region26: #{tpu_custom_call.1} parent=1 // pred_check
      _
    $region27: #{tpu_custom_call.1} parent=1 // pred_check_branch
      %35 = sbr.rel (0) target = $region29
    $region28: #{tpu_custom_call.1} parent=1 // pred_region
      _
    $region29: #{tpu_custom_call.1} parent=1 // pred_fallthru
      _
    // Predicated region
    $region30: #{tpu_custom_call.1} parent=1 // pred_check
      _
    $region31: #{tpu_custom_call.1} parent=1 // pred_check_branch
      %37 = sbr.rel (0) target = $region33
    $region32: #{tpu_custom_call.1} parent=1 // pred_region
      %38 = dma.done [#allocation3], 128
    $region33: #{tpu_custom_call.1} parent=1 // pred_fallthru
      _
    %v39 = vld [vmem:[#allocation2] sm:$0xff]
    %v40 = vld [vmem:[%s1] sm:$0xff]
    %v41 = vld [vmem:[%s1 + $0x8] sm:$0xff]
    %v42 = vld [vmem:[%s2] sm:$0x1]
    %v44 = vlaneseq
    %v45 = vshrl.u32 %v44, 7
    %v46 = vsub.s32 0, %v45
    %v47 = vrot.slane %v42, %v46
    %vm49 = vcmask 130048
    %v51 = vsel %vm49, %v39, 0
    %53 = vmatprep.subr.mxu0 0.0
    %54 = vmatpush1.msra.mxu0 %v40
    %55 = vmatprep.subr.mxu0 0.0
    %56 = vmatpush1.msra.mxu0 %v41
    %57 = vmatprep.subr.mxu0 0.0
    %58 = vmatpush1.msra.mxu0 0.0
    %59 = vmatprep.subr.mxu0 0.0
    %60 = vmatpush1.msra.mxu0 0.0
    %61 = vmatprep.subr.mxu0 0.0
    %62 = vmatpush1.msra.mxu0 0.0
    %63 = vmatprep.subr.mxu0 0.0
    %64 = vmatpush1.msra.mxu0 0.0
    %65 = vmatprep.subr.mxu0 0.0
    %66 = vmatpush1.msra.mxu0 0.0
    %67 = vmatprep.subr.mxu0 0.0
    %68 = vmatpush1.msra.mxu0 0.0
    %69 = vmatprep.subr.mxu0 0.0
    %70 = vmatpush1.msra.mxu0 0.0
    %71 = vmatprep.subr.mxu0 0.0
    %72 = vmatpush1.msra.mxu0 0.0
    %73 = vmatprep.subr.mxu0 0.0
    %74 = vmatpush1.msra.mxu0 0.0
    %75 = vmatprep.subr.mxu0 0.0
    %76 = vmatpush1.msra.mxu0 0.0
    %77 = vmatprep.subr.mxu0 0.0
    %78 = vmatpush1.msra.mxu0 0.0
    %79 = vmatprep.subr.mxu0 0.0
    %80 = vmatpush1.msra.mxu0 0.0
    %81 = vmatprep.subr.mxu0 0.0
    %82 = vmatpush1.msra.mxu0 0.0
    %83 = vmatprep.subr.mxu0 0.0
    %84 = vmatpush1.msra.mxu0 0.0
    %85 = vmatprep.subr.mxu0 0.0
    %86 = vmatpush1.msra.mxu0 0.0
    %87 = vmatprep.subr.mxu0 0.0
    %88 = vmatpush1.msra.mxu0 0.0
    %89 = vmatprep.subr.mxu0 0.0
    %90 = vmatpush1.msra.mxu0 0.0
    %91 = vmatprep.subr.mxu0 0.0
    %92 = vmatpush1.msra.mxu0 0.0
    %93 = vmatprep.subr.mxu0 0.0
    %94 = vmatpush1.msra.mxu0 0.0
    %95 = vmatprep.subr.mxu0 0.0
    %96 = vmatpush1.msra.mxu0 0.0
    %97 = vmatprep.subr.mxu0 0.0
    %98 = vmatpush1.msra.mxu0 0.0
    %99 = vmatprep.subr.mxu0 0.0
    %100 = vmatpush1.msra.mxu0 0.0
    %101 = vmatprep.subr.mxu0 0.0
    %102 = vmatpush1.msra.mxu0 0.0
    %103 = vmatprep.subr.mxu0 0.0
    %104 = vmatpush1.msra.mxu0 0.0
    %105 = vmatprep.subr.mxu0 0.0
    %106 = vmatpush1.msra.mxu0 0.0
    %107 = vmatprep.subr.mxu0 0.0
    %108 = vmatpush1.msra.mxu0 0.0
    %109 = vmatprep.subr.mxu0 0.0
    %110 = vmatpush1.msra.mxu0 0.0
    %111 = vmatprep.subr.mxu0 0.0
    %112 = vmatpush1.msra.mxu0 0.0
    %113 = vmatprep.subr.mxu0 0.0
    %114 = vmatpush1.msra.mxu0 0.0
    %115 = vmatprep.subr.mxu0 0.0
    %116 = vmatpush1.msra.mxu0 0.0
    %117 = vmatprep.mubr.f32.mxu0 0.0
    %118 = vmatmul.mubr.f32.gmra.mrb[0].mxu0 %v51
    %v119 = vpop.f32.mrb[0].mxu0
    %v120 = vadd.f32 %v47, %v119
    %v121 = vpop.f32.mrb[0].mxu0
    %122 = vdwg.mxu0
    %v123 = vmax.f32 %v120, 0.0
    %v124 = vld [vmem:[%s3] sm:$0xff]
    %v125 = vld [vmem:[%s3 + $0x8] sm:$0xff]
    %v126 = vld [vmem:[%s3 + $0x10] sm:$0xff]
    %v127 = vld [vmem:[%s3 + $0x18] sm:$0xff]
    %v128 = vld [vmem:[%s3 + $0x20] sm:$0xff]
    %v129 = vld [vmem:[%s3 + $0x28] sm:$0xff]
    %v130 = vld [vmem:[%s3 + $0x30] sm:$0xff]
    %v131 = vld [vmem:[%s3 + $0x38] sm:$0xff]
    %v132 = vld [vmem:[%s4] sm:$0x1]
    %v134 = vlaneseq
    %v135 = vshrl.u32 %v134, 7
    %v136 = vsub.s32 0, %v135
    %v137 = vrot.slane %v132, %v136
    %vm139 = vcmask 523264
    %v141 = vsel %vm139, %v123, 0
    %143 = vmatprep.subr.mxu0 0.0
    %144 = vmatpush1.msra.mxu0 %v124
    %145 = vmatprep.subr.mxu0 0.0
    %146 = vmatpush1.msra.mxu0 %v125
    %147 = vmatprep.subr.mxu0 0.0
    %148 = vmatpush1.msra.mxu0 %v126
    %149 = vmatprep.subr.mxu0 0.0
    %150 = vmatpush1.msra.mxu0 %v127
    %151 = vmatprep.subr.mxu0 0.0
    %152 = vmatpush1.msra.mxu0 %v128
    %153 = vmatprep.subr.mxu0 0.0
    %154 = vmatpush1.msra.mxu0 %v129
    %155 = vmatprep.subr.mxu0 0.0
    %156 = vmatpush1.msra.mxu0 %v130
    %157 = vmatprep.subr.mxu0 0.0
    %158 = vmatpush1.msra.mxu0 %v131
    %159 = vmatprep.subr.mxu0 0.0
    %160 = vmatpush1.msra.mxu0 0.0
    %161 = vmatprep.subr.mxu0 0.0
    %162 = vmatpush1.msra.mxu0 0.0
    %163 = vmatprep.subr.mxu0 0.0
    %164 = vmatpush1.msra.mxu0 0.0
    %165 = vmatprep.subr.mxu0 0.0
    %166 = vmatpush1.msra.mxu0 0.0
    %167 = vmatprep.subr.mxu0 0.0
    %168 = vmatpush1.msra.mxu0 0.0
    %169 = vmatprep.subr.mxu0 0.0
    %170 = vmatpush1.msra.mxu0 0.0
    %171 = vmatprep.subr.mxu0 0.0
    %172 = vmatpush1.msra.mxu0 0.0
    %173 = vmatprep.subr.mxu0 0.0
    %174 = vmatpush1.msra.mxu0 0.0
    %175 = vmatprep.subr.mxu0 0.0
    %176 = vmatpush1.msra.mxu0 0.0
    %177 = vmatprep.subr.mxu0 0.0
    %178 = vmatpush1.msra.mxu0 0.0
    %179 = vmatprep.subr.mxu0 0.0
    %180 = vmatpush1.msra.mxu0 0.0
    %181 = vmatprep.subr.mxu0 0.0
    %182 = vmatpush1.msra.mxu0 0.0
    %183 = vmatprep.subr.mxu0 0.0
    %184 = vmatpush1.msra.mxu0 0.0
    %185 = vmatprep.subr.mxu0 0.0
    %186 = vmatpush1.msra.mxu0 0.0
    %187 = vmatprep.subr.mxu0 0.0
    %188 = vmatpush1.msra.mxu0 0.0
    %189 = vmatprep.subr.mxu0 0.0
    %190 = vmatpush1.msra.mxu0 0.0
    %191 = vmatprep.subr.mxu0 0.0
    %192 = vmatpush1.msra.mxu0 0.0
    %193 = vmatprep.subr.mxu0 0.0
    %194 = vmatpush1.msra.mxu0 0.0
    %195 = vmatprep.subr.mxu0 0.0
    %196 = vmatpush1.msra.mxu0 0.0
    %197 = vmatprep.subr.mxu0 0.0
    %198 = vmatpush1.msra.mxu0 0.0
    %199 = vmatprep.subr.mxu0 0.0
    %200 = vmatpush1.msra.mxu0 0.0
    %201 = vmatprep.subr.mxu0 0.0
    %202 = vmatpush1.msra.mxu0 0.0
    %203 = vmatprep.subr.mxu0 0.0
    %204 = vmatpush1.msra.mxu0 0.0
    %205 = vmatprep.subr.mxu0 0.0
    %206 = vmatpush1.msra.mxu0 0.0
    %207 = vmatprep.mubr.f32.mxu0 0.0
    %208 = vmatmul.mubr.f32.gmra.mrb[0].mxu0 %v141
    %v209 = vpop.f32.mrb[0].mxu0
    %v210 = vadd.f32 %v137, %v209
    %v211 = vpop.f32.mrb[0].mxu0
    %212 = vdwg.mxu0
    %v213 = vmax.f32 %v210, 0.0
    %v214 = vld [vmem:[%s5] sm:$0xff]
    %v215 = vld [vmem:[%s5 + $0x8] sm:$0xff]
    %v216 = vld [vmem:[%s5 + $0x10] sm:$0xff]
    %v217 = vld [vmem:[%s5 + $0x18] sm:$0xff]
    %v218 = vld [vmem:[%s5 + $0x20] sm:$0xff]
    %v219 = vld [vmem:[%s5 + $0x28] sm:$0xff]
    %v220 = vld [vmem:[%s5 + $0x30] sm:$0xff]
    %v221 = vld [vmem:[%s5 + $0x38] sm:$0xff]
    %v222 = vld [vmem:[%s6] sm:$0x1]
    %v224 = vlaneseq
    %v225 = vshrl.u32 %v224, 7
    %v226 = vsub.s32 0, %v225
    %v227 = vrot.slane %v222, %v226
    %v230 = vsel %vm139, %v213, 0
    %232 = vmatprep.subr.mxu0 0.0
    %233 = vmatpush1.msra.mxu0 %v214
    %234 = vmatprep.subr.mxu0 0.0
    %235 = vmatpush1.msra.mxu0 %v215
    %236 = vmatprep.subr.mxu0 0.0
    %237 = vmatpush1.msra.mxu0 %v216
    %238 = vmatprep.subr.mxu0 0.0
    %239 = vmatpush1.msra.mxu0 %v217
    %240 = vmatprep.subr.mxu0 0.0
    %241 = vmatpush1.msra.mxu0 %v218
    %242 = vmatprep.subr.mxu0 0.0
    %243 = vmatpush1.msra.mxu0 %v219
    %244 = vmatprep.subr.mxu0 0.0
    %245 = vmatpush1.msra.mxu0 %v220
    %246 = vmatprep.subr.mxu0 0.0
    %247 = vmatpush1.msra.mxu0 %v221
    %248 = vmatprep.subr.mxu0 0.0
    %249 = vmatpush1.msra.mxu0 0.0
    %250 = vmatprep.subr.mxu0 0.0
    %251 = vmatpush1.msra.mxu0 0.0
    %252 = vmatprep.subr.mxu0 0.0
    %253 = vmatpush1.msra.mxu0 0.0
    %254 = vmatprep.subr.mxu0 0.0
    %255 = vmatpush1.msra.mxu0 0.0
    %256 = vmatprep.subr.mxu0 0.0
    %257 = vmatpush1.msra.mxu0 0.0
    %258 = vmatprep.subr.mxu0 0.0
    %259 = vmatpush1.msra.mxu0 0.0
    %260 = vmatprep.subr.mxu0 0.0
    %261 = vmatpush1.msra.mxu0 0.0
    %262 = vmatprep.subr.mxu0 0.0
    %263 = vmatpush1.msra.mxu0 0.0
    %264 = vmatprep.subr.mxu0 0.0
    %265 = vmatpush1.msra.mxu0 0.0
    %266 = vmatprep.subr.mxu0 0.0
    %267 = vmatpush1.msra.mxu0 0.0
    %268 = vmatprep.subr.mxu0 0.0
    %269 = vmatpush1.msra.mxu0 0.0
    %270 = vmatprep.subr.mxu0 0.0
    %271 = vmatpush1.msra.mxu0 0.0
    %272 = vmatprep.subr.mxu0 0.0
    %273 = vmatpush1.msra.mxu0 0.0
    %274 = vmatprep.subr.mxu0 0.0
    %275 = vmatpush1.msra.mxu0 0.0
    %276 = vmatprep.subr.mxu0 0.0
    %277 = vmatpush1.msra.mxu0 0.0
    %278 = vmatprep.subr.mxu0 0.0
    %279 = vmatpush1.msra.mxu0 0.0
    %280 = vmatprep.subr.mxu0 0.0
    %281 = vmatpush1.msra.mxu0 0.0
    %282 = vmatprep.subr.mxu0 0.0
    %283 = vmatpush1.msra.mxu0 0.0
    %284 = vmatprep.subr.mxu0 0.0
    %285 = vmatpush1.msra.mxu0 0.0
    %286 = vmatprep.subr.mxu0 0.0
    %287 = vmatpush1.msra.mxu0 0.0
    %288 = vmatprep.subr.mxu0 0.0
    %289 = vmatpush1.msra.mxu0 0.0
    %290 = vmatprep.subr.mxu0 0.0
    %291 = vmatpush1.msra.mxu0 0.0
    %292 = vmatprep.subr.mxu0 0.0
    %293 = vmatpush1.msra.mxu0 0.0
    %294 = vmatprep.subr.mxu0 0.0
    %295 = vmatpush1.msra.mxu0 0.0
    %296 = vmatprep.mubr.f32.mxu0 0.0
    %297 = vmatmul.mubr.f32.gmra.mrb[0].mxu0 %v230
    %v298 = vpop.f32.mrb[0].mxu0
    %v299 = vadd.f32 %v227, %v298
    %v300 = vpop.f32.mrb[0].mxu0
    %301 = vdwg.mxu0
    %vm302 = vcmask 64512
    %303 = vst.msk [vmem:[#allocation5] sm:$0xff] %vm302, %v299
    // Predicated region
    $region34: #{tpu_custom_call.1} parent=1 // pred_check
      _
    $region35: #{tpu_custom_call.1} parent=1 // pred_check_branch
      %305 = sbr.rel (0) target = $region37
    $region36: #{tpu_custom_call.1} parent=1 // pred_region
      %s307 = ssub.s32 128, 128
      %308 = vsyncadd [#allocation4], %s307
      %s310 = sshll.u32 [#allocation5], 4
      %s311 = int_to_ptr.vmem [resolvable:$true] %s310
      %313 = dma.vmem_to_hbm [thread:$0]  %s311, 128, %s7, [#allocation4]
    $region37: #{tpu_custom_call.1} parent=1 // pred_fallthru
      _
    // Predicated region
    $region38: #{tpu_custom_call.1} parent=1 // pred_check
      _
    $region39: #{tpu_custom_call.1} parent=1 // pred_check_branch
      %315 = sbr.rel (0) target = $region41
    $region40: #{tpu_custom_call.1} parent=1 // pred_region
      %316 = dma.done [#allocation4], 128
    $region41: #{tpu_custom_call.1} parent=1 // pred_fallthru
      _
    %317 = vsyncpa [#allocation3], 1
    %318 = vsyncpa [#allocation4], 1

</llo_original>
